<compile_context>
chip_gen: v5e
topology: v5e:2x2
jax: 0.10.0
libtpu: 0.0.40
codegen_flags: <defaults>
</compile_context>

<pallas_src>
import functools

import jax
import jax.numpy as jnp
from jax import lax
from jax.experimental import pallas as pl
from jax.experimental.pallas import tpu as pltpu


def _bce_partial_sum_kernel(pred_ref, obj_ref, out_ref, *, batch, block_b):
    """BCE partial sums for one batch tile.

    pred_ref : (TB, C) pred dtype VMEM   predictions in (0, 1)
    obj_ref  : (TB, C) int8  VMEM        precomputed 0/1 objectness targets
    out_ref  : (1,  C) f32   VMEM        lane-wise partial sum for this tile
    """
    i = pl.program_id(0)
    TB, C = pred_ref.shape

    p = pred_ref[...].astype(jnp.float32)    # upcast on load; compute stays f32
    obj = obj_ref[...] != 0

    # BCE, single log per element (exact since targets are 0/1), torch-style
    # clamp of the log term at -100.
    per_elem = -jnp.maximum(jnp.log(jnp.where(obj, p, 1.0 - p)), -100.0)

    # Rows past the true batch in a partial last tile hold undefined VMEM; keep
    # this a select (not a multiply-by-mask) so NaN/-inf from garbage pred is
    # discarded rather than propagated.
    if batch % block_b != 0:
        row = i * block_b + lax.broadcasted_iota(jnp.int32, (TB, 1), 0)
        per_elem = jnp.where(row < batch, per_elem, 0.0)

    # Sublane-axis reduce (mostly VALU adds); final scalar reduce happens in XLA.
    out_ref[...] = jnp.sum(per_elem, axis=0, keepdims=True)


def deepline_loss(pred, gt_cx, gt_valid, image_size, n_columns, block_b=None):
    """pred: (B, n_columns, 1) in (0,1); gt_cx/gt_valid: (B, max_lines)."""
    B, C, _ = pred.shape
    assert C == n_columns
    W = float(image_size[1])

    pred2d = pred.reshape(B, C)              # native dtype; kernel upcasts

    # --- Objectness precompute: tiny (B, L) scatter in XLA -> int8 (B, C). ----
    # Keep mul-then-div so the column index matches torch's floor(cx*n/W) exactly.
    cxf = gt_cx.astype(jnp.float32)
    x = jnp.floor(cxf * jnp.float32(C) / jnp.float32(W))
    xi = x.astype(jnp.int32)
    xi = jnp.where(xi == C, C - 1, xi)
    valid = gt_valid > 0.5
    xi = jnp.clip(jnp.where(valid, xi, 0), 0, C - 1)   # torch would index-error OOB
    obj = jnp.zeros((B, C), jnp.int8).at[
        jnp.arange(B)[:, None], xi].max(valid.astype(jnp.int8))

    # --- Batch tile: ~2 MiB of pred per buffer, only capped by B. -------------
    # Multiple of 32 so the int8 objectness tile keeps a native layout; partial
    # last tile is handled by the row mask in the kernel.
    if block_b is None:
        block_b = max(512, (2 << 20) // (C * pred2d.dtype.itemsize))
    block_b = min(B, int(block_b))
    if block_b != B:
        block_b = max(32, (block_b // 32) * 32)
    num_blocks = pl.cdiv(B, block_b)

    kernel = functools.partial(_bce_partial_sum_kernel, batch=B, block_b=block_b)

    partial = pl.pallas_call(
        kernel,
        out_shape=jax.ShapeDtypeStruct((num_blocks, C), jnp.float32),
        grid=(num_blocks,),
        in_specs=[
            pl.BlockSpec((block_b, C), lambda i: (i, 0)),
            pl.BlockSpec((block_b, C), lambda i: (i, 0)),
        ],
        out_specs=pl.BlockSpec((1, C), lambda i: (i, 0)),
        compiler_params=pltpu.CompilerParams(
            dimension_semantics=("parallel",)),   # no carry -> shards across TCs
    )(pred2d, obj)

    # TODO(synk): add a second (column) grid axis, block_c multiple of 128, for
    # small-B / very-large-C shapes so the slab still pipelines.
    return jnp.sum(partial) * jnp.float32(1.0 / (B * C))


if __name__ == "__main__":
    key = jax.random.PRNGKey(0)
    k1, k2 = jax.random.split(key, 2)

    B = 2
    n_columns = 128
    image_size = (256, 256)   # (H, W); only W is used by the loss
    max_lines = 8

    # pred must be in (0, 1) for BCE, like the sigmoid output of the detector.
    pred = jax.nn.sigmoid(jax.random.normal(k1, (B, n_columns, 1), jnp.float32))

    # Deterministic synthetic ground truth: per-image line center x-coordinates
    # plus a validity mask (image 0 has 3 lines, image 1 has 5 lines).
    gt_cx = jax.random.uniform(
        k2, (B, max_lines), minval=0.0, maxval=float(image_size[1]))
    n_lines = jnp.array([3, 5], jnp.int32)
    gt_valid = (jnp.arange(max_lines)[None, :] < n_lines[:, None]).astype(jnp.float32)

    loss = deepline_loss(pred, gt_cx, gt_valid, image_size, n_columns)
    jax.block_until_ready(loss)

    # Pure-JAX reference (silent sanity check).
    def _ref(pred, gt_cx, gt_valid):
        W = float(image_size[1])
        C = n_columns
        x = jnp.floor(gt_cx.astype(jnp.float32) * C / W).astype(jnp.int32)
        x = jnp.where(x == C, C - 1, x)
        v = gt_valid > 0.5
        x = jnp.clip(jnp.where(v, x, 0), 0, C - 1)
        objf = jnp.zeros((B, C), jnp.float32).at[
            jnp.arange(B)[:, None], x].max(v.astype(jnp.float32))
        p = pred.reshape(B, C).astype(jnp.float32)
        ll = objf * jnp.maximum(jnp.log(p), -100.0) + \
             (1.0 - objf) * jnp.maximum(jnp.log(1.0 - p), -100.0)
        return -jnp.mean(ll)

    ref = _ref(pred, gt_cx, gt_valid)
    assert jnp.allclose(loss, ref, rtol=1e-5, atol=1e-5), (loss, ref)
    print("KERNEL_OK")
</pallas_src>

<mosaic_0001>
module attributes {stable_mosaic.version = 11 : i64} {
  func.func @_bce_partial_sum_kernel(%arg0: i32, %arg1: memref<2x128xf32, #tpu.memory_space<vmem>>, %arg2: memref<2x128xi8, #tpu.memory_space<vmem>>, %arg3: memref<1x128xf32, #tpu.memory_space<vmem>>) attributes {dimension_semantics = [#tpu.dimension_semantics<parallel>], iteration_bounds = array<i64: 1>, scalar_prefetch = 0 : i64, scratch_operands = 0 : i64, tpu.core_type = #tpu.core_type<tc>, window_params = [{transform_indices = @transform_0, window_bounds = array<i64: 2, 128>}, {transform_indices = @transform_1, window_bounds = array<i64: 2, 128>}, {transform_indices = @transform_2, window_bounds = array<i64: 1, 128>}]} {
    %c0 = arith.constant 0 : index
    %c0_0 = arith.constant 0 : index
    %0 = vector.load %arg1[%c0, %c0_0] : memref<2x128xf32, #tpu.memory_space<vmem>>, vector<2x128xf32>
    %c0_1 = arith.constant 0 : index
    %c0_2 = arith.constant 0 : index
    %1 = vector.load %arg2[%c0_1, %c0_2] : memref<2x128xi8, #tpu.memory_space<vmem>>, vector<2x128xi8>
    %c0_i8 = arith.constant 0 : i8
    %2 = vector.broadcast %c0_i8 : i8 to vector<2x128xi8>
    %3 = arith.cmpi ne, %1, %2 : vector<2x128xi8>
    %cst = arith.constant 1.000000e+00 : f32
    %4 = vector.broadcast %cst : f32 to vector<2x128xf32>
    %5 = arith.subf %4, %0 : vector<2x128xf32>
    %6 = arith.select %3, %0, %5 : vector<2x128xi1>, vector<2x128xf32>
    %7 = math.log %6 : vector<2x128xf32>
    %cst_3 = arith.constant -1.000000e+02 : f32
    %8 = vector.broadcast %cst_3 : f32 to vector<2x128xf32>
    %9 = arith.maximumf %7, %8 : vector<2x128xf32>
    %cst_4 = arith.constant 0.000000e+00 : f32
    %10 = vector.broadcast %cst_4 : f32 to vector<2x128xf32>
    %11 = arith.subf %10, %9 : vector<2x128xf32>
    %cst_5 = arith.constant dense<0.000000e+00> : vector<128xf32>
    %12 = vector.multi_reduction <add>, %11, %cst_5 [0] : vector<2x128xf32> to vector<128xf32>
    %13 = vector.shape_cast %12 : vector<128xf32> to vector<1x128xf32>
    %c0_6 = arith.constant 0 : index
    %c0_7 = arith.constant 0 : index
    %14 = vector.load %arg3[%c0_6, %c0_7] : memref<1x128xf32, #tpu.memory_space<vmem>>, vector<1x128xf32>
    tpu.vector_store %arg3[%c0_6, %c0_7], %13 {strides = array<i32>} : memref<1x128xf32, #tpu.memory_space<vmem>>, vector<1x128xf32>,
    return
  }
  func.func @transform_0(%arg0: i32) -> (i32, i32) {
    %c0_i32 = arith.constant 0 : i32
    %c0_i32_0 = arith.constant 0 : i32
    return %arg0, %c0_i32 : i32, i32
  }
  func.func @transform_1(%arg0: i32) -> (i32, i32) {
    %c0_i32 = arith.constant 0 : i32
    %c0_i32_0 = arith.constant 0 : i32
    return %arg0, %c0_i32 : i32, i32
  }
  func.func @transform_2(%arg0: i32) -> (i32, i32) {
    %c0_i32 = arith.constant 0 : i32
    %c0_i32_0 = arith.constant 0 : i32
    return %arg0, %c0_i32 : i32, i32
  }
}

</mosaic_0001>

<llo_original>
// kernel: tpu_custom_call.1
$region0: #{tpu_custom_call.1}
  #allocation0 [shape = 'u32[]', space=smem, size = 0x4, offset = 0x4, fixed_abs, tag = 'smem constant byte address 0x4 - core index']
  #allocation1 [shape = 'u32[72,128]{1,0:T(1,128)}', space=vmem, size = 0x9000, scoped, tag = 'internal scratch']
  %s0 = inlined_call_operand.hbm [shape: f32[2,128], index: 0, kind: input, shape index: {}]
  %s1 = inlined_call_operand.hbm [shape: s8[2,128], index: 1, kind: input, shape index: {}]
  %s2 = inlined_call_operand.hbm [shape: f32[1,128], index: 2, kind: output, shape index: {}]
  %s3 = sld [smem:[#allocation0]]
  $region26: #{tpu_custom_call.1} parent=0
    _
  %s5 = ssub.s32 1, %s3
  %s6 = scalar_select 0, %s5, %s3
  $region1: #{tpu_custom_call.1} parent=0
    #allocation2 [shape = 'u8[1024]{0}', space=vmem, size = 0x400, scoped, tag = 'input window, operand 0, single buffered']
    #allocation3 [shape = 's32[1]{0}', space=sflag, size = 0x4, scoped, tag = 'scoped memory for tpu_custom_call.1']
    #allocation4 [shape = 's32[1]{0}', space=sflag, size = 0x4, scoped, tag = 'scoped memory for tpu_custom_call.1']
    #allocation5 [shape = 'u8[512]{0}', space=vmem, size = 0x400, scoped, tag = 'input window, operand 1, single buffered']
    #allocation6 [shape = 's32[1]{0}', space=sflag, size = 0x4, scoped, tag = 'scoped memory for tpu_custom_call.1']
    #allocation7 [shape = 'u8[512]{0}', space=vmem, size = 0x400, scoped, tag = 'output window, operand 0, single buffered']
    %7 = vsyncpa [#allocation3], 0
    %8 = vsyncpa [#allocation6], 0
    %9 = vsyncpa [#allocation4], 0
    // Predicated region
    $region2: #{tpu_custom_call.1} parent=1 // pred_check
      _
    $region3: #{tpu_custom_call.1} parent=1 // pred_check_branch
      %11 = sbr.rel (0) target = $region5
    $region4: #{tpu_custom_call.1} parent=1 // pred_region
      %13 = vsyncadd [#allocation3], 0
      %s15 = sshll.u32 %s0, 4
      %s16 = int_to_ptr.hbm [resolvable:$true] %s15
      %s17 = sshll.u32 [#allocation2], 4
      %s18 = int_to_ptr.vmem [resolvable:$true] %s17
      %20 = dma.hbm_to_vmem [thread:$0]  %s16, 32, %s18, [#allocation3]
    $region5: #{tpu_custom_call.1} parent=1 // pred_fallthru
      _
    // Predicated region
    $region6: #{tpu_custom_call.1} parent=1 // pred_check
      _
    $region7: #{tpu_custom_call.1} parent=1 // pred_check_branch
      %22 = sbr.rel (0) target = $region9
    $region8: #{tpu_custom_call.1} parent=1 // pred_region
      %24 = vsyncadd [#allocation6], 0
      %s26 = sshll.u32 %s1, 4
      %s27 = int_to_ptr.hbm [resolvable:$true] %s26
      %s28 = sshll.u32 [#allocation5], 4
      %s29 = int_to_ptr.vmem [resolvable:$true] %s28
      %31 = dma.hbm_to_vmem [thread:$0]  %s27, 16, %s29, [#allocation6]
    $region9: #{tpu_custom_call.1} parent=1 // pred_fallthru
      _
    // Predicated region
    $region10: #{tpu_custom_call.1} parent=1 // pred_check
      _
    $region11: #{tpu_custom_call.1} parent=1 // pred_check_branch
      %33 = sbr.rel (0) target = $region13
    $region12: #{tpu_custom_call.1} parent=1 // pred_region
      %35 = dma.done [#allocation3], 32
    $region13: #{tpu_custom_call.1} parent=1 // pred_fallthru
      _
    // Predicated region
    $region14: #{tpu_custom_call.1} parent=1 // pred_check
      _
    $region15: #{tpu_custom_call.1} parent=1 // pred_check_branch
      %37 = sbr.rel (0) target = $region17
    $region16: #{tpu_custom_call.1} parent=1 // pred_region
      %39 = dma.done [#allocation6], 16
    $region17: #{tpu_custom_call.1} parent=1 // pred_fallthru
      _
    %v42 = vld [vmem:[#allocation2] sm:$0x3]
    %v43 = vld [vmem:[#allocation5] sm:$0x1]
    %vm44 = vnez %v43
    %v45 = vsub.f32 1.0, %v42
    %v46 = vsel %vm44, 16843009, 0
    %v47 = vunpack.c.0.s8 %v46
    %vm48 = vcmp.ne.s32.totalorder %v47, 0
    %v49 = vsel %vm48, %v42, %v45
    %v50 = vlog2.pop %v49
    %v51 = vmul.f32 %v50, 0.6931472
    %v52 = vmax.f32 %v51, -100.0
    %v53 = vsub.f32 0.0, %v52
    %vm54 = vcmask 1041408
    %v55 = vsel %vm54, %v53, 0.0
    %v56 = vrot.slane %v55, 4
    %v57 = vadd.f32 %v55, %v56
    %v58 = vrot.slane %v57, 2
    %v59 = vadd.f32 %v57, %v58
    %v60 = vrot.slane %v59, 1
    %v61 = vadd.f32 %v59, %v60
    %62 = vst [vmem:[#allocation7] sm:$0x1] %v61
    // Predicated region
    $region18: #{tpu_custom_call.1} parent=1 // pred_check
      _
    $region19: #{tpu_custom_call.1} parent=1 // pred_check_branch
      %64 = sbr.rel (0) target = $region21
    $region20: #{tpu_custom_call.1} parent=1 // pred_region
      %66 = vsyncadd [#allocation4], 0
      %s68 = sshll.u32 [#allocation7], 4
      %s69 = int_to_ptr.vmem [resolvable:$true] %s68
      %s70 = sshll.u32 %s2, 4
      %s71 = int_to_ptr.hbm [resolvable:$true] %s70
      %73 = dma.vmem_to_hbm [thread:$0]  %s69, 16, %s71, [#allocation4]
    $region21: #{tpu_custom_call.1} parent=1 // pred_fallthru
      _
    // Predicated region
    $region22: #{tpu_custom_call.1} parent=1 // pred_check
      _
    $region23: #{tpu_custom_call.1} parent=1 // pred_check_branch
      %75 = sbr.rel (0) target = $region25
    $region24: #{tpu_custom_call.1} parent=1 // pred_region
      %77 = dma.done [#allocation4], 16
    $region25: #{tpu_custom_call.1} parent=1 // pred_fallthru
      _
    %78 = vsyncpa [#allocation3], 1
    %79 = vsyncpa [#allocation6], 1
    %80 = vsyncpa [#allocation4], 1

</llo_original>
